<compile_context>
chip_gen: v7x
topology: tpu7x:2x2x1
jax: 0.10.0
libtpu: 0.0.40
codegen_flags: <defaults>
</compile_context>

<pallas_src>
import functools

import numpy as np
import jax
import jax.numpy as jnp
from jax.experimental import pallas as pl
from jax.experimental.pallas import tpu as pltpu


_MAX_TILE_BYTES = 4 * 1024 * 1024     # per-input, per-buffer tile budget
_VMEM_LIMIT_BYTES = 48 * 1024 * 1024  # safe on v5e/v6e (128 MiB) and v7x (64 MiB)


def _uncertainty_loss_kernel(tgt_ref, heads_ref, xg_ref, xn_ref, w_ref,
                             out_ref, acc_ref, *,
                             inv_batch, inv_nel, tile_rows, lane):
    """Grid = (n_splits, steps).  Each (c, i) step reduces one (tile_rows, lane)
    slice of the flattened regression slab into a lane-parallel VMEM
    accumulator; the last step of each split folds the accumulator (plus, on
    split 0, the fused 4-head cross-entropy and the log-sigma regularizer)
    into that split's output block.

    tgt_ref   : (B, 1)            int32 VMEM -- class targets (column vector)
    heads_ref : (4, B, C)         any   VMEM -- stacked classification heads (resident)
    xg_ref    : (tile_rows, lane) any   VMEM -- tile of flattened inputs_g
    xn_ref    : (tile_rows, lane) any   VMEM -- tile of flattened inputs_normal
    w_ref     : (3,)              f32   SMEM -- [1/s1^2, 1/s2^2, 2*ls1 + 2*ls2]
    out_ref   : (1, 8, 128)       f32   VMEM -- per-split partial loss (broadcast value)
    acc_ref   : (8, lane)         f32   VMEM scratch -- lane-parallel SSE partials
    """
    c = pl.program_id(0)
    i = pl.program_id(1)

    @pl.when(i == 0)
    def _init():
        acc_ref[...] = jnp.zeros_like(acc_ref)

    # --- streamed MSE partial: pure VPU, no per-step cross-lane reduce ------
    d = xg_ref[...].astype(jnp.float32) - xn_ref[...].astype(jnp.float32)
    dd = d * d
    if tile_rows % 8 == 0:
        acc_ref[...] += jnp.sum(dd.reshape(tile_rows // 8, 8, lane), axis=0)
    else:
        # Tiny / ragged tiles: fold into the first sublane row instead.
        acc_ref[0:1, :] = acc_ref[0:1, :] + jnp.sum(dd, axis=0, keepdims=True)

    # --- finalize: one XLU reduce + fused 4-head CE + weighted combine ------
    @pl.when(i == pl.num_programs(1) - 1)
    def _finalize():
        sse = jnp.sum(acc_ref[...])
        val = w_ref[1] * sse * inv_nel            # partial: L2 term of this split

        # Fused cross-entropy over the stacked heads (credited only to split 0).
        lg = heads_ref[...].astype(jnp.float32)                  # (4, B, C)
        m = jnp.max(lg, axis=-1, keepdims=True)
        lse = m + jnp.log(jnp.sum(jnp.exp(lg - m), axis=-1, keepdims=True))
        b = tgt_ref.shape[0]
        ncls = lg.shape[-1]
        col = jax.lax.broadcasted_iota(jnp.int32, (b, ncls), 1)
        mask = (col == tgt_ref[...])[None, :, :]                 # (1, B, C)
        tgt_logit = jnp.sum(jnp.where(mask, lg, 0.0), axis=-1, keepdims=True)
        l1 = jnp.sum(lse - tgt_logit) * inv_batch                # sum heads, mean batch
        ce_term = w_ref[0] * l1 + w_ref[2]

        val = val + jnp.where(c == 0, ce_term, jnp.float32(0.0))
        out_ref[...] = jnp.broadcast_to(val, out_ref.shape).astype(jnp.float32)


def _pick_lane(total):
    """Largest lane width in {512, 256, 128} that divides total (no pad copy)."""
    for lane in (512, 256, 128):
        if total % lane == 0:
            return lane, 0
    # TODO(synk): mask the ragged tail in-kernel to avoid even this small pad
    # copy; identical zero padding on both operands keeps the sum exact today.
    lane = 128
    return lane, (-total) % lane


def _to_slab(x, lane, pad):
    flat = x.reshape(-1)            # free row-major relayout, no extra HBM pass
    if pad:
        flat = jnp.concatenate([flat, jnp.zeros((pad,), flat.dtype)])
    return flat.reshape(-1, lane)


def _pick_tile_rows(rows, max_tile_rows, min_tiles=4):
    """Largest divisor of `rows` that is a multiple of 8, <= max_tile_rows and
    yields >= min_tiles grid steps when possible (so the DMA is pipelined)."""
    if rows <= 8:
        return rows
    target = min(max_tile_rows, max(8, rows // min_tiles))
    target = max(8, (target // 8) * 8)
    for t in range(target, 7, -8):
        if rows % t == 0:
            return t
    for t in range(min(rows, max_tile_rows), 0, -1):
        if rows % t == 0:
            return t
    return rows


def uncertainty_weighted_loss(out1, out2, out3, out_cat, targets,
                              inputs_g, inputs_normal, log_sigma1, log_sigma2):
    B, C = out1.shape
    n_el = int(np.prod(inputs_g.shape))

    lane, pad = _pick_lane(n_el)
    xg = _to_slab(inputs_g, lane, pad)
    xn = _to_slab(inputs_normal, lane, pad)
    rows = xg.shape[0]

    itemsize = jnp.dtype(xg.dtype).itemsize
    max_tile_rows = max(8, (_MAX_TILE_BYTES // (lane * itemsize)) // 8 * 8)
    tile_rows = _pick_tile_rows(rows, max_tile_rows)
    num_tiles = rows // tile_rows

    # Leading "parallel" axis: split the stream into two halves when there are
    # enough tiles (multi-TC parts run them concurrently; 1-TC parts just loop).
    n_splits = 2 if (num_tiles >= 4 and num_tiles % 2 == 0) else 1
    steps = num_tiles // n_splits

    heads = jnp.stack([out1, out2, out3, out_cat])        # (4, B, C) -- tiny
    tgt2d = targets.astype(jnp.int32).reshape(B, 1)

    weights = jnp.stack([
        jnp.exp(-2.0 * log_sigma1),                       # 1 / sigma1^2
        jnp.exp(-2.0 * log_sigma2),                       # 1 / sigma2^2
        2.0 * log_sigma1 + 2.0 * log_sigma2,              # additive regularizer
    ]).astype(jnp.float32)

    kernel = functools.partial(_uncertainty_loss_kernel,
                               inv_batch=1.0 / B, inv_nel=1.0 / n_el,
                               tile_rows=tile_rows, lane=lane)

    out = pl.pallas_call(
        kernel,
        out_shape=jax.ShapeDtypeStruct((n_splits, 8, 128), jnp.float32),
        grid=(n_splits, steps),
        in_specs=[
            pl.BlockSpec((B, 1), lambda c, i: (0, 0)),               # targets
            pl.BlockSpec((4, B, C), lambda c, i: (0, 0, 0)),         # fused heads
            pl.BlockSpec((tile_rows, lane), lambda c, i: (c * steps + i, 0)),  # xg tile
            pl.BlockSpec((tile_rows, lane), lambda c, i: (c * steps + i, 0)),  # xn tile
            pl.BlockSpec(memory_space=pltpu.MemorySpace.SMEM),       # weights (3,)
        ],
        out_specs=pl.BlockSpec((1, 8, 128), lambda c, i: (c, 0, 0)),
        scratch_shapes=[pltpu.VMEM((8, lane), jnp.float32)],
        compiler_params=pltpu.CompilerParams(
            dimension_semantics=("parallel", "arbitrary"),
            vmem_limit_bytes=_VMEM_LIMIT_BYTES),
    )(tgt2d, heads, xg, xn, weights)

    return jnp.sum(out[:, 0, 0])


def reference_loss(out1, out2, out3, out_cat, targets,
                   inputs_g, inputs_normal, log_sigma1, log_sigma2):
    def ce(logits, t):
        logp = jax.nn.log_softmax(logits.astype(jnp.float32), axis=-1)
        return -jnp.mean(jnp.take_along_axis(logp, t[:, None], axis=-1))

    L1 = ce(out1, targets) + ce(out2, targets) + ce(out3, targets) + ce(out_cat, targets)
    L2 = jnp.mean((inputs_g.astype(jnp.float32) - inputs_normal.astype(jnp.float32)) ** 2)
    s1 = jnp.exp(log_sigma1)
    s2 = jnp.exp(log_sigma2)
    return L1 / s1 ** 2 + L2 / s2 ** 2 + 2.0 * log_sigma1 + 2.0 * log_sigma2


def _run_case(key, B, C, img_shape):
    k1, k2, k3, k4, k5, k6, k7 = jax.random.split(key, 7)
    out1 = jax.random.normal(k1, (B, C), dtype=jnp.float32)
    out2 = jax.random.normal(k2, (B, C), dtype=jnp.float32)
    out3 = jax.random.normal(k3, (B, C), dtype=jnp.float32)
    out_cat = jax.random.normal(k4, (B, C), dtype=jnp.float32)
    targets = jax.random.randint(k5, (B,), 0, C, dtype=jnp.int32)
    inputs_g = jax.random.normal(k6, img_shape, dtype=jnp.float32)
    inputs_normal = jax.random.normal(k7, img_shape, dtype=jnp.float32)

    # Deterministic parameter init per the module: log(sigma) with sigma=1.0
    log_sigma1 = jnp.float32(jnp.log(1.0))
    log_sigma2 = jnp.float32(jnp.log(1.0))

    loss = uncertainty_weighted_loss(out1, out2, out3, out_cat, targets,
                                     inputs_g, inputs_normal,
                                     log_sigma1, log_sigma2)
    loss = jax.block_until_ready(loss)
    ref = reference_loss(out1, out2, out3, out_cat, targets,
                         inputs_g, inputs_normal, log_sigma1, log_sigma2)
    np.testing.assert_allclose(np.asarray(loss), np.asarray(ref),
                               rtol=1e-4, atol=1e-5)


if __name__ == "__main__":
    key = jax.random.PRNGKey(0)
    k_a, k_b = jax.random.split(key)

    # Case 1: tiny (single tile) -- batch=8, classes=16, regression (2,4,16,16)
    _run_case(k_a, B=8, C=16, img_shape=(2, 4, 16, 16))

    # Case 2: multi-tile / dual-split path -- batch=4, classes=10, (4,8,32,32)
    _run_case(k_b, B=4, C=10, img_shape=(4, 8, 32, 32))

    print("KERNEL_OK")
</pallas_src>

<mosaic_0001>
module attributes {stable_mosaic.version = 11 : i64} {
  func.func @_uncertainty_loss_kernel(%arg0: i32, %arg1: i32, %arg2: memref<8x1xi32, #tpu.memory_space<vmem>>, %arg3: memref<4x8x16xf32, #tpu.memory_space<vmem>>, %arg4: memref<4x512xf32, #tpu.memory_space<vmem>>, %arg5: memref<4x512xf32, #tpu.memory_space<vmem>>, %arg6: memref<3xf32, #tpu.memory_space<smem>>, %arg7: memref<1x8x128xf32, #tpu.memory_space<vmem>>, %arg8: memref<8x512xf32, #tpu.memory_space<vmem>>) attributes {dimension_semantics = [#tpu.dimension_semantics<parallel>, #tpu.dimension_semantics<arbitrary>], iteration_bounds = array<i64: 1, 1>, scalar_prefetch = 0 : i64, scratch_operands = 1 : i64, tpu.core_type = #tpu.core_type<tc>, window_params = [{pipeline_mode = #tpu.pipeline_mode<synchronous>, transform_indices = @transform_0, window_bounds = array<i64: 8, 1>}, {pipeline_mode = #tpu.pipeline_mode<synchronous>, transform_indices = @transform_1, window_bounds = array<i64: 4, 8, 16>}, {transform_indices = @transform_2, window_bounds = array<i64: 4, 512>}, {transform_indices = @transform_3, window_bounds = array<i64: 4, 512>}, {transform_indices = @transform_4, window_bounds = array<i64: 3>}, {transform_indices = @transform_5, window_bounds = array<i64: 1, 8, 128>}]} {
    %c0_i32 = arith.constant 0 : i32
    %0 = arith.cmpi eq, %arg1, %c0_i32 : i32
    %1 = arith.extui %0 : i1 to i32
    %c0_i32_0 = arith.constant 0 : i32
    %2 = arith.cmpi ne, %1, %c0_i32_0 : i32
    scf.if %2 {
      %cst_10 = arith.constant 0.000000e+00 : f32
      %15 = vector.broadcast %cst_10 : f32 to vector<8x512xf32>
      %c0_11 = arith.constant 0 : index
      %c0_12 = arith.constant 0 : index
      %16 = vector.load %arg8[%c0_11, %c0_12] : memref<8x512xf32, #tpu.memory_space<vmem>>, vector<8x512xf32>
      tpu.vector_store %arg8[%c0_11, %c0_12], %15 {strides = array<i32>} : memref<8x512xf32, #tpu.memory_space<vmem>>, vector<8x512xf32>,
    } else {
    }
    %c0 = arith.constant 0 : index
    %c0_1 = arith.constant 0 : index
    %3 = vector.load %arg4[%c0, %c0_1] : memref<4x512xf32, #tpu.memory_space<vmem>>, vector<4x512xf32>
    %c0_2 = arith.constant 0 : index
    %c0_3 = arith.constant 0 : index
    %4 = vector.load %arg5[%c0_2, %c0_3] : memref<4x512xf32, #tpu.memory_space<vmem>>, vector<4x512xf32>
    %5 = arith.subf %3, %4 : vector<4x512xf32>
    %6 = arith.mulf %5, %5 : vector<4x512xf32>
    %c0_4 = arith.constant 0 : index
    %c0_5 = arith.constant 0 : index
    %7 = vector.load %arg8[%c0_4, %c0_5] : memref<8x512xf32, #tpu.memory_space<vmem>>, vector<1x512xf32>
    %cst = arith.constant dense<0.000000e+00> : vector<512xf32>
    %8 = vector.multi_reduction <add>, %6, %cst [0] : vector<4x512xf32> to vector<512xf32>
    %9 = vector.shape_cast %8 : vector<512xf32> to vector<1x512xf32>
    %10 = arith.addf %7, %9 : vector<1x512xf32>
    %c0_6 = arith.constant 0 : index
    %c0_7 = arith.constant 0 : index
    %11 = vector.load %arg8[%c0_6, %c0_7] : memref<8x512xf32, #tpu.memory_space<vmem>>, vector<1x512xf32>
    tpu.vector_store %arg8[%c0_6, %c0_7], %10 {strides = array<i32>} : memref<8x512xf32, #tpu.memory_space<vmem>>, vector<1x512xf32>,
    %c0_i32_8 = arith.constant 0 : i32
    %12 = arith.cmpi eq, %arg1, %c0_i32_8 : i32
    %13 = arith.extui %12 : i1 to i32
    %c0_i32_9 = arith.constant 0 : i32
    %14 = arith.cmpi ne, %13, %c0_i32_9 : i32
    scf.if %14 {
      %c0_10 = arith.constant 0 : index
      %c0_11 = arith.constant 0 : index
      %15 = vector.load %arg8[%c0_10, %c0_11] : memref<8x512xf32, #tpu.memory_space<vmem>>, vector<8x512xf32>
      %16 = vector.shape_cast %15 : vector<8x512xf32> to vector<1x8x512xf32>
      %cst_12 = arith.constant dense<0.000000e+00> : vector<1xf32>
      %17 = vector.multi_reduction <add>, %16, %cst_12 [1, 2] : vector<1x8x512xf32> to vector<1xf32>
      %18 = vector.shape_cast %17 : vector<1xf32> to vector<1x1x1xf32>
      %19 = vector.extract %18[0, 0, 0] : f32 from vector<1x1x1xf32>
      %c1 = arith.constant 1 : index
      %20 = memref.load %arg6[%c1] : memref<3xf32, #tpu.memory_space<smem>>
      %21 = arith.mulf %20, %19 : f32
      %cst_13 = arith.constant 4.8828125E-4 : f32
      %22 = arith.mulf %21, %cst_13 : f32
      %c0_14 = arith.constant 0 : index
      %c0_15 = arith.constant 0 : index
      %c0_16 = arith.constant 0 : index
      %23 = vector.load %arg3[%c0_14, %c0_15, %c0_16] : memref<4x8x16xf32, #tpu.memory_space<vmem>>, vector<4x8x16xf32>
      %cst_17 = arith.constant dense<0xFF800000> : vector<4x8xf32>
      %24 = vector.multi_reduction <maximumf>, %23, %cst_17 [2] : vector<4x8x16xf32> to vector<4x8xf32>
      %25 = vector.shape_cast %24 : vector<4x8xf32> to vector<4x8x1xf32>
      %26 = vector.broadcast %25 : vector<4x8x1xf32> to vector<4x8x16xf32>
      %27 = arith.subf %23, %26 : vector<4x8x16xf32>
      %28 = math.exp %27 : vector<4x8x16xf32>
      %cst_18 = arith.constant dense<0.000000e+00> : vector<4x8xf32>
      %29 = vector.multi_reduction <add>, %28, %cst_18 [2] : vector<4x8x16xf32> to vector<4x8xf32>
      %30 = vector.shape_cast %29 : vector<4x8xf32> to vector<4x8x1xf32>
      %31 = math.log %30 : vector<4x8x1xf32>
      %32 = arith.addf %25, %31 : vector<4x8x1xf32>
      %33 = tpu.iota {dimensions = array<i32: 1>} : vector<8x16xi32>
      %c0_19 = arith.constant 0 : index
      %c0_20 = arith.constant 0 : index
      %34 = vector.load %arg2[%c0_19, %c0_20] : memref<8x1xi32, #tpu.memory_space<vmem>>, vector<8x1xi32>
      %35 = vector.broadcast %34 : vector<8x1xi32> to vector<8x16xi32>
      %36 = arith.cmpi eq, %33, %35 : vector<8x16xi32>
      %37 = vector.shape_cast %36 : vector<8x16xi1> to vector<1x8x16xi1>
      %cst_21 = arith.constant 0.000000e+00 : f32
      %38 = vector.shape_cast %37 : vector<1x8x16xi1> to vector<1x8x16xi1>
      %39 = vector.broadcast %38 : vector<1x8x16xi1> to vector<4x8x16xi1>
      %40 = vector.broadcast %cst_21 : f32 to vector<4x8x16xf32>
      %41 = arith.select %39, %23, %40 : vector<4x8x16xi1>, vector<4x8x16xf32>
      %cst_22 = arith.constant dense<0.000000e+00> : vector<4x8xf32>
      %42 = vector.multi_reduction <add>, %41, %cst_22 [2] : vector<4x8x16xf32> to vector<4x8xf32>
      %43 = vector.shape_cast %42 : vector<4x8xf32> to vector<4x8x1xf32>
      %44 = arith.subf %32, %43 : vector<4x8x1xf32>
      %45 = vector.shape_cast %44 : vector<4x8x1xf32> to vector<1x4x8x1xf32>
      %cst_23 = arith.constant dense<0.000000e+00> : vector<1xf32>
      %46 = vector.multi_reduction <add>, %45, %cst_23 [1, 2, 3] : vector<1x4x8x1xf32> to vector<1xf32>
      %47 = vector.shape_cast %46 : vector<1xf32> to vector<1x1x1x1xf32>
      %48 = vector.extract %47[0, 0, 0, 0] : f32 from vector<1x1x1x1xf32>
      %cst_24 = arith.constant 1.250000e-01 : f32
      %49 = arith.mulf %48, %cst_24 : f32
      %c0_25 = arith.constant 0 : index
      %50 = memref.load %arg6[%c0_25] : memref<3xf32, #tpu.memory_space<smem>>
      %51 = arith.mulf %50, %49 : f32
      %c2 = arith.constant 2 : index
      %52 = memref.load %arg6[%c2] : memref<3xf32, #tpu.memory_space<smem>>
      %53 = arith.addf %51, %52 : f32
      %c0_i32_26 = arith.constant 0 : i32
      %54 = arith.cmpi eq, %arg0, %c0_i32_26 : i32
      %cst_27 = arith.constant 0.000000e+00 : f32
      %55 = arith.select %54, %53, %cst_27 : f32
      %56 = arith.addf %22, %55 : f32
      %57 = vector.broadcast %56 : f32 to vector<1x8x128xf32>
      %c0_28 = arith.constant 0 : index
      %c0_29 = arith.constant 0 : index
      %c0_30 = arith.constant 0 : index
      %58 = vector.load %arg7[%c0_28, %c0_29, %c0_30] : memref<1x8x128xf32, #tpu.memory_space<vmem>>, vector<1x8x128xf32>
      tpu.vector_store %arg7[%c0_28, %c0_29, %c0_30], %57 {strides = array<i32>} : memref<1x8x128xf32, #tpu.memory_space<vmem>>, vector<1x8x128xf32>,
    } else {
    }
    return
  }
  func.func @transform_0(%arg0: i32, %arg1: i32) -> (i32, i32) {
    %c0_i32 = arith.constant 0 : i32
    %c0_i32_0 = arith.constant 0 : i32
    %c0_i32_1 = arith.constant 0 : i32
    return %c0_i32, %c0_i32_0 : i32, i32
  }
  func.func @transform_1(%arg0: i32, %arg1: i32) -> (i32, i32, i32) {
    %c0_i32 = arith.constant 0 : i32
    %c0_i32_0 = arith.constant 0 : i32
    %c0_i32_1 = arith.constant 0 : i32
    %c0_i32_2 = arith.constant 0 : i32
    return %c0_i32, %c0_i32_0, %c0_i32_1 : i32, i32, i32
  }
  func.func @transform_2(%arg0: i32, %arg1: i32) -> (i32, i32) {
    %c1_i32 = arith.constant 1 : i32
    %0 = arith.muli %arg0, %c1_i32 : i32
    %1 = arith.addi %0, %arg1 : i32
    %c0_i32 = arith.constant 0 : i32
    %c0_i32_0 = arith.constant 0 : i32
    return %1, %c0_i32 : i32, i32
  }
  func.func @transform_3(%arg0: i32, %arg1: i32) -> (i32, i32) {
    %c1_i32 = arith.constant 1 : i32
    %0 = arith.muli %arg0, %c1_i32 : i32
    %1 = arith.addi %0, %arg1 : i32
    %c0_i32 = arith.constant 0 : i32
    %c0_i32_0 = arith.constant 0 : i32
    return %1, %c0_i32 : i32, i32
  }
  func.func @transform_4(%arg0: i32, %arg1: i32) -> i32 {
    %c0_i32 = arith.constant 0 : i32
    %c0_i32_0 = arith.constant 0 : i32
    return %c0_i32 : i32
  }
  func.func @transform_5(%arg0: i32, %arg1: i32) -> (i32, i32, i32) {
    %c0_i32 = arith.constant 0 : i32
    %c0_i32_0 = arith.constant 0 : i32
    %c0_i32_1 = arith.constant 0 : i32
    return %arg0, %c0_i32, %c0_i32_0 : i32, i32, i32
  }
}

</mosaic_0001>

<llo_original>
// kernel: tpu_custom_call.1
$region0: #{tpu_custom_call.1}
  #allocation0 [shape = 'u32[]', space=smem, size = 0x4, offset = 0x4, fixed_abs, tag = 'smem constant byte address 0x4 - core index']
  #allocation1 [shape = 'u32[144,128]{1,0:T(1,128)}', space=vmem, size = 0x12000, scoped, tag = 'internal scratch']
  #allocation2 [shape = 'f32[8,512]{1,0:T(8,128)}', space=vmem, size = 0x4000, scoped, tag = 'scratch operand']
  %s0 = inlined_call_operand.vmem [shape: s32[8,1], index: 0, kind: input, shape index: {}]
  %s1 = inlined_call_operand.hbm [shape: f32[4,8,16], index: 1, kind: input, shape index: {}]
  %s2 = inlined_call_operand.vmem [shape: f32[4,512], index: 2, kind: input, shape index: {}]
  %s3 = inlined_call_operand.hbm [shape: f32[4,512], index: 3, kind: input, shape index: {}]
  %s4 = inlined_call_operand.vmem [shape: f32[3], index: 4, kind: input, shape index: {}]
  %s5 = inlined_call_operand.hbm [shape: f32[1,8,128], index: 5, kind: output, shape index: {}]
  %s6 = sld [smem:[#allocation0]]
  $region50: #{tpu_custom_call.1} parent=0
    _
  %s8 = ssub.s32 1, %s6
  %s9 = scalar_select 0, %s8, %s6
  $region1: #{tpu_custom_call.1} parent=0
    #allocation3 [shape = 'u8[16384]{0}', space=vmem, size = 0x4000, scoped, tag = 'input window, operand 1, single buffered']
    #allocation4 [shape = 's32[1]{0}', space=sflag, size = 0x4, scoped, tag = 'scoped memory for tpu_custom_call.1']
    #allocation5 [shape = 's32[1]{0}', space=sflag, size = 0x4, scoped, tag = 'scoped memory for tpu_custom_call.1']
    #allocation6 [shape = 's32[1]{0}', space=sflag, size = 0x4, scoped, tag = 'scoped memory for tpu_custom_call.1']
    #allocation7 [shape = 'u8[8192]{0}', space=vmem, size = 0x2000, scoped, tag = 'input window, operand 3, single buffered']
    #allocation8 [shape = 's32[1]{0}', space=sflag, size = 0x4, scoped, tag = 'scoped memory for tpu_custom_call.1']
    #allocation9 [shape = 'u8[512]{0}', space=smem, size = 0x200, scoped, tag = 'input window, operand 4, single buffered']
    #allocation10 [shape = 'u8[4096]{0}', space=vmem, size = 0x1000, scoped, tag = 'output window, operand 0, single buffered']
    %10 = vsyncpa [#allocation4], 0
    %11 = vsyncpa [#allocation8], 0
    %12 = vsyncpa [#allocation6], 0
    %13 = vsyncpa [#allocation5], 0
    // Predicated region
    $region2: #{tpu_custom_call.1} parent=1 // pred_check
      _
    $region3: #{tpu_custom_call.1} parent=1 // pred_check_branch
      %15 = sbr.rel (0) target = $region5
    $region4: #{tpu_custom_call.1} parent=1 // pred_region
      _
    $region5: #{tpu_custom_call.1} parent=1 // pred_fallthru
      _
    // Predicated region
    $region6: #{tpu_custom_call.1} parent=1 // pred_check
      _
    $region7: #{tpu_custom_call.1} parent=1 // pred_check_branch
      %17 = sbr.rel (0) target = $region9
    $region8: #{tpu_custom_call.1} parent=1 // pred_region
      %s19 = ssub.s32 512, 512
      %20 = vsyncadd [#allocation4], %s19
      %s21 = sshll.u32 [#allocation3], 4
      %s22 = int_to_ptr.vmem [resolvable:$true] %s21
      %27 = dma.hbm_to_vmem [thread:$0]  %s1, 512, %s22, [#allocation4], 128, 128, 8
    $region9: #{tpu_custom_call.1} parent=1 // pred_fallthru
      _
    // Predicated region
    $region10: #{tpu_custom_call.1} parent=1 // pred_check
      _
    $region11: #{tpu_custom_call.1} parent=1 // pred_check_branch
      %29 = sbr.rel (0) target = $region13
    $region12: #{tpu_custom_call.1} parent=1 // pred_region
      %s30 = sadd.s32 0, 0
      %p31 = scmp.lt.s32.totalorder %s30, 0
      %s32 = scalar_select %p31, %s30, 0
      %s33 = smul.addr %s32, 4
      %s34 = smul.addr %s33, 4
      %s35 = scalar_lea.vmem %s2, %s34
      %s36 = sadd.s32 0, 0
    $region13: #{tpu_custom_call.1} parent=1 // pred_fallthru
      _
    // Predicated region
    $region14: #{tpu_custom_call.1} parent=1 // pred_check
      _
    $region15: #{tpu_custom_call.1} parent=1 // pred_check_branch
      %38 = sbr.rel (0) target = $region17
    $region16: #{tpu_custom_call.1} parent=1 // pred_region
      %s39 = sadd.s32 0, 0
      %s41 = ssub.s32 256, 256
      %42 = vsyncadd [#allocation8], %s41
      %s43 = smul.addr %s39, 4
      %s44 = smul.addr %s43, 64
      %s45 = scalar_lea.hbm %s3, %s44
      %s47 = sshll.u32 [#allocation7], 4
      %s48 = int_to_ptr.vmem [resolvable:$true] %s47
      %50 = dma.hbm_to_vmem [thread:$0]  %s45, 256, %s48, [#allocation8]
    $region17: #{tpu_custom_call.1} parent=1 // pred_fallthru
      _
    // Predicated region
    $region18: #{tpu_custom_call.1} parent=1 // pred_check
      _
    $region19: #{tpu_custom_call.1} parent=1 // pred_check_branch
      %52 = sbr.rel (0) target = $region21
    $region20: #{tpu_custom_call.1} parent=1 // pred_region
      %s54 = ssub.s32 16, 16
      %55 = vsyncadd [#allocation6], %s54
      %s57 = sshll.u32 %s4, 4
      %s58 = int_to_ptr.vmem [resolvable:$true] %s57
      %60 = dma.vmem_to_smem %s58, 16, [#allocation9], [#allocation6]
    $region21: #{tpu_custom_call.1} parent=1 // pred_fallthru
      _
    // Predicated region
    $region22: #{tpu_custom_call.1} parent=1 // pred_check
      _
    $region23: #{tpu_custom_call.1} parent=1 // pred_check_branch
      %62 = sbr.rel (0) target = $region25
    $region24: #{tpu_custom_call.1} parent=1 // pred_region
      %63 = dma.done [#allocation4], 512
    $region25: #{tpu_custom_call.1} parent=1 // pred_fallthru
      _
    // Predicated region
    $region26: #{tpu_custom_call.1} parent=1 // pred_check
      _
    $region27: #{tpu_custom_call.1} parent=1 // pred_check_branch
      %65 = sbr.rel (0) target = $region29
    $region28: #{tpu_custom_call.1} parent=1 // pred_region
      %66 = dma.done [#allocation8], 256
    $region29: #{tpu_custom_call.1} parent=1 // pred_fallthru
      _
    // Predicated region
    $region30: #{tpu_custom_call.1} parent=1 // pred_check
      _
    $region31: #{tpu_custom_call.1} parent=1 // pred_check_branch
      %68 = sbr.rel (0) target = $region33
    $region32: #{tpu_custom_call.1} parent=1 // pred_region
      %69 = dma.done [#allocation6], 16
    $region33: #{tpu_custom_call.1} parent=1 // pred_fallthru
      _
    %70 = sfence
    %s71 = sadd.s32 0, 0
    %p72 = scmp.lt.s32.totalorder %s71, 0
    %s73 = scalar_select %p72, %s71, 0
    %s74 = smul.addr %s73, 4
    %s75 = smul.addr %s74, 4
    %s76 = scalar_lea.vmem %s2, %s75
    %s77 = sadd.s32 0, 0
    %p78 = scmp.lt.s32.totalorder %s77, 0
    %s79 = scalar_select %p78, %s77, 0
    %s80 = smul.addr %s79, 4
    %s81 = smul.addr %s80, 4
    %s82 = scalar_lea.vmem %s2, %s81
    %s83 = sadd.s32 0, 0
    %s84 = sadd.s32 0, 0
    %p85 = scmp.eq.s32.totalorder 0, 0
    // Predicated region
    $region34: #{tpu_custom_call.1} parent=1 // pred_check
      %p86 = pneg %p85
    $region35: #{tpu_custom_call.1} parent=1 // pred_check_branch
      %88 = sbr.rel (%p86) target = $region37
    $region36: #{tpu_custom_call.1} parent=1 // pred_region
      %89 = vst [vmem:[#allocation2] sm:$0xff] 0.0
      %90 = vst [vmem:[#allocation2 + $0x8] sm:$0xff] 0.0
      %91 = vst [vmem:[#allocation2 + $0x10] sm:$0xff] 0.0
      %92 = vst [vmem:[#allocation2 + $0x18] sm:$0xff] 0.0
    $region37: #{tpu_custom_call.1} parent=1 // pred_fallthru
      _
    %v93 = vld [vmem:[%s82] sm:$0xff]
    %v94 = vld [vmem:[%s82 + $0x8] sm:$0xff]
    %v95 = vld [vmem:[#allocation7] sm:$0xff]
    %v96 = vld [vmem:[#allocation7 + $0x8] sm:$0xff]
    %v97 = vsub.f32 %v93, %v95
    %v98 = vsub.f32 %v94, %v96
    %v99 = vmul.f32 %v97, %v97
    %v100 = vmul.f32 %v98, %v98
    %v101 = vld [vmem:[#allocation2] ss:$8 sm:$0xf]
    %v104 = vcombine.high %v99, %v99
    %v105 = vcombine.high %v100, %v100
    %vm108 = vcmask 1043456
    %v109 = vsel %vm108, %v99, 0.0
    %v110 = vrot.slane %v109, 4
    %v111 = vadd.f32 %v109, %v110
    %v112 = vrot.slane %v111, 2
    %v113 = vadd.f32 %v111, %v112
    %v114 = vrot.slane %v113, 1
    %v115 = vadd.f32 %v113, %v114
    %v116 = vsel %vm108, %v104, 0.0
    %v117 = vrot.slane %v116, 4
    %v118 = vadd.f32 %v116, %v117
    %v119 = vrot.slane %v118, 2
    %v120 = vadd.f32 %v118, %v119
    %v121 = vrot.slane %v120, 1
    %v122 = vadd.f32 %v120, %v121
    %v123 = vsel %vm108, %v100, 0.0
    %v124 = vrot.slane %v123, 4
    %v125 = vadd.f32 %v123, %v124
    %v126 = vrot.slane %v125, 2
    %v127 = vadd.f32 %v125, %v126
    %v128 = vrot.slane %v127, 1
    %v129 = vadd.f32 %v127, %v128
    %v130 = vsel %vm108, %v105, 0.0
    %v131 = vrot.slane %v130, 4
    %v132 = vadd.f32 %v130, %v131
    %v133 = vrot.slane %v132, 2
    %v134 = vadd.f32 %v132, %v133
    %v135 = vrot.slane %v134, 1
    %v136 = vadd.f32 %v134, %v135
    %v141 = vcombine.low %v115, %v122
    %v142 = vcombine.low %v129, %v136
    %v144 = vunpack.c.l.s4 1966171168
    %v145 = vunpack.c.0.s8 %v144
    %v146 = vlaneseq
    %v147 = vshrl.u32 %v146, 7
    %v148 = vsub.s32 %v145, %v147
    %v149 = vrot.slane %v141, %v148
    %v151 = vunpack.c.l.s4 1966171168
    %v152 = vunpack.c.0.s8 %v151
    %v153 = vlaneseq
    %v154 = vshrl.u32 %v153, 7
    %v155 = vsub.s32 %v152, %v154
    %v156 = vrot.slane %v142, %v155
    %v157 = vcombine.low %v149, %v156
    %v159 = vunpack.c.l.s4 1966171168
    %v160 = vunpack.c.0.s8 %v159
    %v161 = vlaneseq
    %v162 = vshrl.u32 %v161, 7
    %v163 = vsub.s32 %v160, %v162
    %v164 = vrot.slane %v157, %v163
    %v166 = vadd.f32 %v101, %v164
    %v167 = vlaneseq
    %vm168 = vcmp.ge.s32.totalorder %v167, 0
    %vm169 = vcmp.lt.s32.totalorder %v167, 512
    %vm170 = vmand %vm168, %vm169
    %171 = vst.msk [vmem:[#allocation2] ss:$8 sm:$0xf] %vm170, %v166
    %172 = vst.msk [vmem:[#allocation2] ss:$8 sm:$0x0] %vm170, %v166
    // Predicated region
    $region38: #{tpu_custom_call.1} parent=1 // pred_check
      %p173 = pneg %p85
    $region39: #{tpu_custom_call.1} parent=1 // pred_check_branch
      %175 = sbr.rel (%p173) target = $region41
    $region40: #{tpu_custom_call.1} parent=1 // pred_region
      %v176 = vld [vmem:[#allocation2] sm:$0xff]
      %v177 = vld [vmem:[#allocation2 + $0x8] sm:$0xff]
      %v178 = vld [vmem:[#allocation2 + $0x10] sm:$0xff]
      %v179 = vld [vmem:[#allocation2 + $0x18] sm:$0xff]
      %v180 = vadd.f32 %v176, %v177
      %v181 = vadd.f32 %v180, %v178
      %v182 = vadd.f32 %v181, %v179
      %183 = vadd.xlane.f32.xlu0 %v182
      %v184 = vpop.xlane.xlu0 %183
      %v185 = vrot.slane %v184, 4
      %v186 = vadd.f32 %v184, %v185
      %v187 = vrot.slane %v186, 2
      %v188 = vadd.f32 %v186, %v187
      %v189 = vrot.slane %v188, 1
      %v190 = vadd.f32 %v188, %v189
      %s191 = vtos %v190
      %s192 = sld [smem:[#allocation9 + $0x1]]
      %s193 = smul.f32 %s192, %s191
      %s194 = smul.f32 %s193, 0.00048828125
      %v195 = vld [vmem:[#allocation3] sm:$0xff]
      %v196 = vld [vmem:[#allocation3 + $0x8] sm:$0xff]
      %v197 = vld [vmem:[#allocation3 + $0x10] sm:$0xff]
      %v198 = vld [vmem:[#allocation3 + $0x18] sm:$0xff]
      %vm199 = vcmask 130048
      %v200 = vsel %vm199, %v195, -inf
      %201 = vmax.xlane.f32.xlu0 %v200
      %v202 = vpop.xlane.xlu0 %201
      %v203 = vsel %vm199, %v196, -inf
      %204 = vmax.xlane.f32.xlu0 %v203
      %v205 = vpop.xlane.xlu0 %204
      %v206 = vsel %vm199, %v197, -inf
      %207 = vmax.xlane.f32.xlu0 %v206
      %v208 = vpop.xlane.xlu0 %207
      %v209 = vsel %vm199, %v198, -inf
      %210 = vmax.xlane.f32.xlu0 %v209
      %v211 = vpop.xlane.xlu0 %210
      %v212 = vsub.f32 %v195, %v202
      %v213 = vsub.f32 %v196, %v205
      %v214 = vsub.f32 %v197, %v208
      %v215 = vsub.f32 %v198, %v211
      %v216 = vmul.f32 %v212, 1.442695
      %v217 = vpow.pop %v216
      %v218 = vmul.f32 %v213, 1.442695
      %v219 = vpow.pop %v218
      %v220 = vmul.f32 %v214, 1.442695
      %v221 = vpow.pop %v220
      %v222 = vmul.f32 %v215, 1.442695
      %v223 = vpow.pop %v222
      %v224 = vsel %vm199, %v217, 0.0
      %225 = vadd.xlane.f32.xlu0 %v224
      %v226 = vpop.xlane.xlu0 %225
      %v227 = vsel %vm199, %v219, 0.0
      %228 = vadd.xlane.f32.xlu0 %v227
      %v229 = vpop.xlane.xlu0 %228
      %v230 = vsel %vm199, %v221, 0.0
      %231 = vadd.xlane.f32.xlu0 %v230
      %v232 = vpop.xlane.xlu0 %231
      %v233 = vsel %vm199, %v223, 0.0
      %234 = vadd.xlane.f32.xlu0 %v233
      %v235 = vpop.xlane.xlu0 %234
      %v236 = vlog2.pop %v226
      %v237 = vmul.f32 %v236, 0.6931472
      %v238 = vlog2.pop %v229
      %v239 = vmul.f32 %v238, 0.6931472
      %v240 = vlog2.pop %v232
      %v241 = vmul.f32 %v240, 0.6931472
      %v242 = vlog2.pop %v235
      %v243 = vmul.f32 %v242, 0.6931472
      %v244 = vadd.f32 %v202, %v237
      %v245 = vadd.f32 %v205, %v239
      %v246 = vadd.f32 %v208, %v241
      %v247 = vadd.f32 %v211, %v243
      %v248 = vlaneseq
      %v249 = vand.u32 %v248, 127
      %v250 = vld [vmem:[%s0] sm:$0xff]
      %251 = vset.pattern.permute.xlu0 0
      %252 = vperm.xlu0 %251, %v250
      %v253 = vpop.permute.xlu0 %252
      %vm254 = vcmp.eq.s32.totalorder %v249, %v253
      %v255 = vsel %vm254, 1, 0
      %vm256 = vcmp.eq.s32.totalorder %v255, 1
      %v257 = vsel %vm256, %v195, 0.0
      %v258 = vsel %vm256, %v196, 0.0
      %v259 = vsel %vm256, %v197, 0.0
      %v260 = vsel %vm256, %v198, 0.0
      %v261 = vsel %vm199, %v257, 0.0
      %262 = vadd.xlane.f32.xlu0 %v261
      %v263 = vpop.xlane.xlu0 %262
      %v264 = vsel %vm199, %v258, 0.0
      %265 = vadd.xlane.f32.xlu0 %v264
      %v266 = vpop.xlane.xlu0 %265
      %v267 = vsel %vm199, %v259, 0.0
      %268 = vadd.xlane.f32.xlu0 %v267
      %v269 = vpop.xlane.xlu0 %268
      %v270 = vsel %vm199, %v260, 0.0
      %271 = vadd.xlane.f32.xlu0 %v270
      %v272 = vpop.xlane.xlu0 %271
      %v273 = vsub.f32 %v244, %v263
      %v274 = vsub.f32 %v245, %v266
      %v275 = vsub.f32 %v246, %v269
      %v276 = vsub.f32 %v247, %v272
      %vm277 = vcmask 7168
      %v278 = vsel %vm277, %v273, 0.0
      %v279 = vsel %vm277, %v274, 0.0
      %v280 = vadd.f32 %v278, %v279
      %v281 = vsel %vm277, %v275, 0.0
      %v282 = vadd.f32 %v280, %v281
      %v283 = vsel %vm277, %v276, 0.0
      %v284 = vadd.f32 %v282, %v283
      %285 = vadd.xlane.f32.xlu0 %v284
      %v286 = vpop.xlane.xlu0 %285
      %v287 = vrot.slane %v286, 4
      %v288 = vadd.f32 %v286, %v287
      %v289 = vrot.slane %v288, 2
      %v290 = vadd.f32 %v288, %v289
      %v291 = vrot.slane %v290, 1
      %v292 = vadd.f32 %v290, %v291
      %s293 = vtos %v292
      %s294 = smul.f32 %s293, 0.125
      %s295 = sld [smem:[#allocation9]]
      %s296 = smul.f32 %s295, %s294
      %s297 = sld [smem:[#allocation9 + $0x2]]
      %s298 = sadd.f32 %s296, %s297
      %p299 = scmp.eq.s32.totalorder 0, 0
      %s300 = scalar_select %p299, %s298, 0.0
      %s301 = sadd.f32 %s194, %s300
      %v302 = vstv %s301
      %303 = vst [vmem:[#allocation10] sm:$0xff] %v302
    $region41: #{tpu_custom_call.1} parent=1 // pred_fallthru
      _
    // Predicated region
    $region42: #{tpu_custom_call.1} parent=1 // pred_check
      _
    $region43: #{tpu_custom_call.1} parent=1 // pred_check_branch
      %305 = sbr.rel (0) target = $region45
    $region44: #{tpu_custom_call.1} parent=1 // pred_region
      %s307 = ssub.s32 128, 128
      %308 = vsyncadd [#allocation5], %s307
      %s310 = sshll.u32 [#allocation10], 4
      %s311 = int_to_ptr.vmem [resolvable:$true] %s310
      %313 = dma.vmem_to_hbm [thread:$0]  %s311, 128, %s5, [#allocation5]
    $region45: #{tpu_custom_call.1} parent=1 // pred_fallthru
      _
    // Predicated region
    $region46: #{tpu_custom_call.1} parent=1 // pred_check
      _
    $region47: #{tpu_custom_call.1} parent=1 // pred_check_branch
      %315 = sbr.rel (0) target = $region49
    $region48: #{tpu_custom_call.1} parent=1 // pred_region
      %316 = dma.done [#allocation5], 128
    $region49: #{tpu_custom_call.1} parent=1 // pred_fallthru
      _
    %317 = vsyncpa [#allocation4], 1
    %318 = vsyncpa [#allocation8], 1
    %319 = vsyncpa [#allocation5], 1
    %320 = vsyncpa [#allocation6], 1

</llo_original>
